<compile_context>
chip_gen: v6e
topology: v6e:2x2x1
jax: 0.10.0
libtpu: 0.0.40
codegen_flags: <defaults>
</compile_context>

<pallas_src>
import jax
import jax.numpy as jnp
from jax.experimental import pallas as pl
from jax.experimental.pallas import tpu as pltpu

_LANE = 128
_CHUNK = 128  # batch rows per inner sub-block


def _round_up(x, m):
    return ((x + m - 1) // m) * m


def _chip_defaults():
    """(default_tile_b, vmem_limit_bytes), chosen from physical VMEM size."""
    try:
        vmem_cap = int(pltpu.get_tpu_info().vmem_capacity_bytes)
    except Exception:
        vmem_cap = 64 * 1024 * 1024          # conservative (v7x-sized) fallback
    if vmem_cap >= 100 * 1024 * 1024:        # v5e / v6e: 128 MiB physical VMEM
        return 1024, 64 * 1024 * 1024
    return 512, 40 * 1024 * 1024             # v7x: 64 MiB physical per TC


def _mlp_kernel(x_ref, w1_ref, b1_ref, w2_ref, b2_ref, o_ref):
    """relu(x @ w1 + b1) @ w2 + b2 for one (tile_b, D) batch tile.

    Layer 2 (output width 1) never touches the MXU or a whole-tile transpose:
    the batch tile is processed in 128-row chunks so h stays in ~16 vregs, the
    per-chunk transpose is a cheap XLU burst, and a VPU multiply + sublane
    reduction emits a lane-dense (1, 128) segment of the output row.
    """
    b1 = b1_ref[...]            # (1, H_pad)  f32
    w2 = w2_ref[...]            # (H_pad, 1)  f32
    b2 = b2_ref[0, 0]           # scalar      f32 (SMEM)
    tile_b = x_ref.shape[0]
    n_chunks = tile_b // _CHUNK

    # Fully unrolled chunk loop with static, 128-aligned slices; nothing is
    # carried between chunks so per-chunk live ranges stay small.
    for c in range(n_chunks):
        lo, hi = c * _CHUNK, (c + 1) * _CHUNK
        xc = x_ref[lo:hi, :]                                        # (CHUNK, D)      bf16
        h = jnp.dot(xc, w1_ref[...],
                    preferred_element_type=jnp.float32)             # (CHUNK, H_pad)  f32, MXU
        h = jnp.maximum(h + b1, 0.0)                                # VPU
        ht = h.T                                                    # (H_pad, CHUNK)  small XLU transpose
        oc = jnp.sum(ht * w2, axis=0, keepdims=True) + b2           # (1, CHUNK)      lane-dense
        o_ref[:, lo:hi] = oc.astype(o_ref.dtype)


def linear_lag_forward(x, w1, b1, w2, b2, *, tile_b=None,
                       matmul_dtype=jnp.bfloat16, interpret=False):
    """Pallas forward for LinearLagModel: relu(x @ w1 + b1) @ w2 + b2.

    x: (B, D); w1: (D, H); b1: (H,); w2: (H, 1); b2: (1,)
    Returns (B, 1) float32.  The layer-1 matmul is fed to the MXU in
    `matmul_dtype` (bf16 by default) with f32 accumulation; pass
    matmul_dtype=None for a pure-f32 MXU feed.
    """
    B, D = x.shape
    H = w1.shape[1]
    out_dtype = jnp.float32

    # Hidden dim zero-padded to full 128-lane vregs (numerically exact:
    # relu(0 + 0) = 0 and 0 * w2 = 0).
    H_pad = _round_up(H, _LANE)
    if H_pad != H:
        w1 = jnp.pad(w1, ((0, 0), (0, H_pad - H)))
        b1 = jnp.pad(b1, (0, H_pad - H))
        w2 = jnp.pad(w2, ((0, H_pad - H), (0, 0)))

    # Per-chip tile / VMEM sizing, then cap tile_b so the "parallel" batch axis
    # has at least two grid steps whenever B allows (v7x megacore sharding).
    default_tile_b, vmem_limit = _chip_defaults()
    if tile_b is None:
        tile_b = default_tile_b
    tile_b = min(tile_b, _round_up(pl.cdiv(B, 2), _CHUNK))
    tile_b = max(_round_up(tile_b, _CHUNK), _CHUNK)

    B_pad = _round_up(B, tile_b)
    if B_pad != B:
        # Padded rows produce relu(b1) @ w2 + b2, not zeros; the final [:B]
        # slice below is load-bearing.
        x = jnp.pad(x, ((0, B_pad - B), (0, 0)))
    grid = (B_pad // tile_b,)

    # MXU-feed dtype: halves HBM traffic for x (the only array scaling with B).
    in_dtype = jnp.dtype(matmul_dtype) if matmul_dtype is not None else jnp.dtype(x.dtype)
    x_in = x.astype(in_dtype)
    w1_in = w1.astype(in_dtype)
    b1_2d = b1.reshape(1, H_pad).astype(jnp.float32)
    w2_in = w2.astype(jnp.float32)
    b2_2d = b2.reshape(1, 1).astype(jnp.float32)

    flops = 2 * B_pad * D * H_pad + 4 * B_pad * H_pad
    bytes_accessed = ((B_pad * D + D * H_pad) * in_dtype.itemsize
                      + (2 * H_pad + 1) * 4 + B_pad * 4)

    out = pl.pallas_call(
        _mlp_kernel,
        # Lane-dense output slab: one (1, tile_b) lane segment per batch tile.
        out_shape=jax.ShapeDtypeStruct((1, B_pad), out_dtype),
        grid=grid,
        in_specs=[
            # x scales with B -> tiled & double-buffered by the pipeline.
            pl.BlockSpec((tile_b, D), lambda i: (i, 0)),
            # Weights / biases: constant block index -> fetched once, resident.
            pl.BlockSpec((D, H_pad), lambda i: (0, 0)),
            pl.BlockSpec((1, H_pad), lambda i: (0, 0)),
            pl.BlockSpec((H_pad, 1), lambda i: (0, 0)),
            # b2 is one scalar -> SMEM, not a padded VMEM tile.
            pl.BlockSpec(memory_space=pltpu.MemorySpace.SMEM),
        ],
        out_specs=pl.BlockSpec((1, tile_b), lambda i: (0, i)),
        compiler_params=pltpu.CompilerParams(
            dimension_semantics=("parallel",),   # shard batch tiles across TCs
            vmem_limit_bytes=vmem_limit,
        ),
        cost_estimate=pl.CostEstimate(flops=int(flops), transcendentals=0,
                                      bytes_accessed=int(bytes_accessed)),
        interpret=interpret,
    )(x_in, w1_in, b1_2d, w2_in, b2_2d)

    # (1, B_pad) lane-dense slab -> (B, 1) like nn.Linear(H, 1).
    # The [:B] slice drops the padded rows — keep it.
    return out.reshape(B_pad, 1)[:B]


def init_params(key, input_dim, hidden_dim=64):
    """Deterministic init mimicking nn.Linear default (uniform +/- 1/sqrt(fan_in))."""
    k1, k2, k3, k4 = jax.random.split(key, 4)
    bound1 = 1.0 / jnp.sqrt(input_dim)
    bound2 = 1.0 / jnp.sqrt(hidden_dim)
    w1 = jax.random.uniform(k1, (input_dim, hidden_dim), jnp.float32, -bound1, bound1)
    b1 = jax.random.uniform(k2, (hidden_dim,), jnp.float32, -bound1, bound1)
    w2 = jax.random.uniform(k3, (hidden_dim, 1), jnp.float32, -bound2, bound2)
    b2 = jax.random.uniform(k4, (1,), jnp.float32, -bound2, bound2)
    return w1, b1, w2, b2


def reference_forward(x, w1, b1, w2, b2, matmul_dtype=None):
    if matmul_dtype is not None:
        x = x.astype(matmul_dtype)
        w1 = w1.astype(matmul_dtype)
    h = jnp.maximum(jnp.dot(x, w1, preferred_element_type=jnp.float32) + b1, 0.0)
    return h @ w2 + b2


if __name__ == "__main__":
    key = jax.random.PRNGKey(0)
    k_x, k_p = jax.random.split(key)

    batch = 8
    input_dim = 32   # flattened lagged features
    hidden_dim = 64
    # NOTE: at these toy shapes the pallas_call fixed overhead dominates and
    # D=32 uses only 32 of the MXU's contraction depth — don't draw tuning
    # conclusions here; real benchmarking wants B >= ~1024 and D % 128 == 0.

    x = jax.random.normal(k_x, (batch, input_dim), dtype=jnp.float32)
    w1, b1, w2, b2 = init_params(k_p, input_dim, hidden_dim)

    out = linear_lag_forward(x, w1, b1, w2, b2)
    out = jax.block_until_ready(out)
    assert out.shape == (batch, 1)

    # Tight check vs. a reference using the same bf16 MXU feed ...
    ref_matched = reference_forward(x, w1, b1, w2, b2, matmul_dtype=jnp.bfloat16)
    assert jnp.allclose(out, ref_matched, atol=1e-3, rtol=1e-3), \
        "mismatch vs bf16-matched reference"
    # ... and a loose check vs. the pure-f32 module semantics (bf16 feed error).
    ref_f32 = reference_forward(x, w1, b1, w2, b2)
    assert jnp.allclose(out, ref_f32, atol=5e-2, rtol=5e-2), \
        "mismatch vs f32 reference"

    print("KERNEL_OK")
</pallas_src>

<mosaic_0001>
module attributes {stable_mosaic.version = 11 : i64} {
  func.func @_mlp_kernel(%arg0: i32, %arg1: memref<128x32xbf16, #tpu.memory_space<vmem>>, %arg2: memref<32x128xbf16, #tpu.memory_space<vmem>>, %arg3: memref<1x128xf32, #tpu.memory_space<vmem>>, %arg4: memref<128x1xf32, #tpu.memory_space<vmem>>, %arg5: memref<1x1xf32, #tpu.memory_space<smem>>, %arg6: memref<1x128xf32, #tpu.memory_space<vmem>>) attributes {dimension_semantics = [#tpu.dimension_semantics<parallel>], iteration_bounds = array<i64: 1>, scalar_prefetch = 0 : i64, scratch_operands = 0 : i64, tpu.core_type = #tpu.core_type<tc>, window_params = [{transform_indices = @transform_0, window_bounds = array<i64: 128, 32>}, {pipeline_mode = #tpu.pipeline_mode<synchronous>, transform_indices = @transform_1, window_bounds = array<i64: 32, 128>}, {pipeline_mode = #tpu.pipeline_mode<synchronous>, transform_indices = @transform_2, window_bounds = array<i64: 1, 128>}, {pipeline_mode = #tpu.pipeline_mode<synchronous>, transform_indices = @transform_3, window_bounds = array<i64: 128, 1>}, {transform_indices = @transform_4, window_bounds = array<i64: 1, 1>}, {transform_indices = @transform_5, window_bounds = array<i64: 1, 128>}]} {
    %c0 = arith.constant 0 : index
    %c0_0 = arith.constant 0 : index
    %0 = vector.load %arg3[%c0, %c0_0] : memref<1x128xf32, #tpu.memory_space<vmem>>, vector<1x128xf32>
    %c0_1 = arith.constant 0 : index
    %c0_2 = arith.constant 0 : index
    %1 = vector.load %arg4[%c0_1, %c0_2] : memref<128x1xf32, #tpu.memory_space<vmem>>, vector<128x1xf32>
    %c0_3 = arith.constant 0 : index
    %c0_4 = arith.constant 0 : index
    %2 = memref.load %arg5[%c0_3, %c0_4] : memref<1x1xf32, #tpu.memory_space<smem>>
    %c0_5 = arith.constant 0 : index
    %c0_6 = arith.constant 0 : index
    %3 = vector.load %arg1[%c0_5, %c0_6] : memref<128x32xbf16, #tpu.memory_space<vmem>>, vector<128x32xbf16>
    %c0_7 = arith.constant 0 : index
    %c0_8 = arith.constant 0 : index
    %4 = vector.load %arg2[%c0_7, %c0_8] : memref<32x128xbf16, #tpu.memory_space<vmem>>, vector<32x128xbf16>
    %cst = arith.constant dense<0.000000e+00> : vector<128x128xf32>
    %5 = tpu.matmul %3, %4, %cst {dimension_numbers = #tpu.dot_dimension_numbers<[1], [0], [0], [1], [0, 0, 1, 1], [], []>} : vector<128x32xbf16>, vector<32x128xbf16>, vector<128x128xf32> -> vector<128x128xf32>
    %6 = vector.broadcast %0 : vector<1x128xf32> to vector<128x128xf32>
    %7 = arith.addf %5, %6 : vector<128x128xf32>
    %cst_9 = arith.constant 0.000000e+00 : f32
    %8 = vector.broadcast %cst_9 : f32 to vector<128x128xf32>
    %9 = arith.maximumf %7, %8 : vector<128x128xf32>
    %10 = tpu.transpose %9, [1, 0] : vector<128x128xf32> -> vector<128x128xf32>
    %11 = vector.broadcast %1 : vector<128x1xf32> to vector<128x128xf32>
    %12 = arith.mulf %10, %11 : vector<128x128xf32>
    %cst_10 = arith.constant dense<0.000000e+00> : vector<128xf32>
    %13 = vector.multi_reduction <add>, %12, %cst_10 [0] : vector<128x128xf32> to vector<128xf32>
    %14 = vector.shape_cast %13 : vector<128xf32> to vector<1x128xf32>
    %15 = vector.broadcast %2 : f32 to vector<1x128xf32>
    %16 = arith.addf %14, %15 : vector<1x128xf32>
    %c0_11 = arith.constant 0 : index
    %c0_12 = arith.constant 0 : index
    %17 = vector.load %arg6[%c0_11, %c0_12] : memref<1x128xf32, #tpu.memory_space<vmem>>, vector<1x128xf32>
    tpu.vector_store %arg6[%c0_11, %c0_12], %16 {strides = array<i32>} : memref<1x128xf32, #tpu.memory_space<vmem>>, vector<1x128xf32>,
    return
  }
  func.func @transform_0(%arg0: i32) -> (i32, i32) {
    %c0_i32 = arith.constant 0 : i32
    %c0_i32_0 = arith.constant 0 : i32
    return %arg0, %c0_i32 : i32, i32
  }
  func.func @transform_1(%arg0: i32) -> (i32, i32) {
    %c0_i32 = arith.constant 0 : i32
    %c0_i32_0 = arith.constant 0 : i32
    %c0_i32_1 = arith.constant 0 : i32
    return %c0_i32, %c0_i32_0 : i32, i32
  }
  func.func @transform_2(%arg0: i32) -> (i32, i32) {
    %c0_i32 = arith.constant 0 : i32
    %c0_i32_0 = arith.constant 0 : i32
    %c0_i32_1 = arith.constant 0 : i32
    return %c0_i32, %c0_i32_0 : i32, i32
  }
  func.func @transform_3(%arg0: i32) -> (i32, i32) {
    %c0_i32 = arith.constant 0 : i32
    %c0_i32_0 = arith.constant 0 : i32
    %c0_i32_1 = arith.constant 0 : i32
    return %c0_i32, %c0_i32_0 : i32, i32
  }
  func.func @transform_4(%arg0: i32) -> (i32, i32) {
    %c0_i32 = arith.constant 0 : i32
    %c0_i32_0 = arith.constant 0 : i32
    %c0_i32_1 = arith.constant 0 : i32
    return %c0_i32, %c0_i32_0 : i32, i32
  }
  func.func @transform_5(%arg0: i32) -> (i32, i32) {
    %c0_i32 = arith.constant 0 : i32
    %c0_i32_0 = arith.constant 0 : i32
    return %c0_i32, %arg0 : i32, i32
  }
}

</mosaic_0001>

<llo_original>
// kernel: tpu_custom_call.1
$region0: #{tpu_custom_call.1}
  #allocation0 [shape = 'u32[]', space=smem, size = 0x4, offset = 0x4, fixed_abs, tag = 'smem constant byte address 0x4 - core index']
  #allocation1 [shape = 'u32[144,128]{1,0:T(1,128)}', space=vmem, size = 0x12000, scoped, tag = 'internal scratch']
  #allocation2 [shape = 'f32[1,1]{1,0:T(1,128)S(6)}', space=smem, size = 0x200, scoped, tag = 'scoped memory for tpu_custom_call.1']
  %s0 = inlined_call_operand.vmem [shape: bf16[128,32], index: 0, kind: input, shape index: {}]
  %s1 = inlined_call_operand.vmem [shape: bf16[32,128], index: 1, kind: input, shape index: {}]
  %s2 = inlined_call_operand.vmem [shape: f32[1,128], index: 2, kind: input, shape index: {}]
  %s3 = inlined_call_operand.vmem [shape: f32[128,1], index: 3, kind: input, shape index: {}]
  %s4 = inlined_call_operand.<no memory space> [shape: f32[1,1], index: 4, kind: input, shape index: {}]
  %s5 = inlined_call_operand.hbm [shape: f32[1,128], index: 5, kind: output, shape index: {}]
  %s6 = sld [smem:[#allocation0]]
  $region30: #{tpu_custom_call.1} parent=0
    _
  %s8 = ssub.s32 1, %s6
  %s9 = scalar_select 0, %s8, %s6
  %10 = sst [smem:[#allocation2]] %s4
  $region1: #{tpu_custom_call.1} parent=0
    #allocation3 [shape = 'u8[512]{0}', space=vmem, size = 0x400, scoped, tag = 'output window, operand 0, single buffered']
    #allocation4 [shape = 's32[1]{0}', space=sflag, size = 0x4, scoped, tag = 'scoped memory for tpu_custom_call.1']
    %11 = vsyncpa [#allocation4], 0
    // Predicated region
    $region2: #{tpu_custom_call.1} parent=1 // pred_check
      _
    $region3: #{tpu_custom_call.1} parent=1 // pred_check_branch
      %13 = sbr.rel (0) target = $region5
    $region4: #{tpu_custom_call.1} parent=1 // pred_region
      _
    $region5: #{tpu_custom_call.1} parent=1 // pred_fallthru
      _
    // Predicated region
    $region6: #{tpu_custom_call.1} parent=1 // pred_check
      _
    $region7: #{tpu_custom_call.1} parent=1 // pred_check_branch
      %15 = sbr.rel (0) target = $region9
    $region8: #{tpu_custom_call.1} parent=1 // pred_region
      _
    $region9: #{tpu_custom_call.1} parent=1 // pred_fallthru
      _
    // Predicated region
    $region10: #{tpu_custom_call.1} parent=1 // pred_check
      _
    $region11: #{tpu_custom_call.1} parent=1 // pred_check_branch
      %17 = sbr.rel (0) target = $region13
    $region12: #{tpu_custom_call.1} parent=1 // pred_region
      _
    $region13: #{tpu_custom_call.1} parent=1 // pred_fallthru
      _
    // Predicated region
    $region14: #{tpu_custom_call.1} parent=1 // pred_check
      _
    $region15: #{tpu_custom_call.1} parent=1 // pred_check_branch
      %19 = sbr.rel (0) target = $region17
    $region16: #{tpu_custom_call.1} parent=1 // pred_region
      _
    $region17: #{tpu_custom_call.1} parent=1 // pred_fallthru
      _
    // Predicated region
    $region18: #{tpu_custom_call.1} parent=1 // pred_check
      _
    $region19: #{tpu_custom_call.1} parent=1 // pred_check_branch
      %21 = sbr.rel (0) target = $region21
    $region20: #{tpu_custom_call.1} parent=1 // pred_region
      _
    $region21: #{tpu_custom_call.1} parent=1 // pred_fallthru
      _
    %v23 = vld [vmem:[%s2] sm:$0x1]
    %v24 = vld [vmem:[%s3] sm:$0xff]
    %v25 = vld [vmem:[%s3 + $0x8] sm:$0xff]
    %v26 = vld [vmem:[%s3 + $0x10] sm:$0xff]
    %v27 = vld [vmem:[%s3 + $0x18] sm:$0xff]
    %v28 = vld [vmem:[%s3 + $0x20] sm:$0xff]
    %v29 = vld [vmem:[%s3 + $0x28] sm:$0xff]
    %v30 = vld [vmem:[%s3 + $0x30] sm:$0xff]
    %v31 = vld [vmem:[%s3 + $0x38] sm:$0xff]
    %v32 = vld [vmem:[%s3 + $0x40] sm:$0xff]
    %v33 = vld [vmem:[%s3 + $0x48] sm:$0xff]
    %v34 = vld [vmem:[%s3 + $0x50] sm:$0xff]
    %v35 = vld [vmem:[%s3 + $0x58] sm:$0xff]
    %v36 = vld [vmem:[%s3 + $0x60] sm:$0xff]
    %v37 = vld [vmem:[%s3 + $0x68] sm:$0xff]
    %v38 = vld [vmem:[%s3 + $0x70] sm:$0xff]
    %v39 = vld [vmem:[%s3 + $0x78] sm:$0xff]
    %s40 = sld [smem:[#allocation2]]
    %v41 = vld [vmem:[%s0] sm:$0xf]
    %v42 = vld [vmem:[%s0 + $0x4] sm:$0xf]
    %v43 = vld [vmem:[%s0 + $0x8] sm:$0xf]
    %v44 = vld [vmem:[%s0 + $0xc] sm:$0xf]
    %v45 = vld [vmem:[%s0 + $0x10] sm:$0xf]
    %v46 = vld [vmem:[%s0 + $0x14] sm:$0xf]
    %v47 = vld [vmem:[%s0 + $0x18] sm:$0xf]
    %v48 = vld [vmem:[%s0 + $0x1c] sm:$0xf]
    %v49 = vld [vmem:[%s0 + $0x20] sm:$0xf]
    %v50 = vld [vmem:[%s0 + $0x24] sm:$0xf]
    %v51 = vld [vmem:[%s0 + $0x28] sm:$0xf]
    %v52 = vld [vmem:[%s0 + $0x2c] sm:$0xf]
    %v53 = vld [vmem:[%s0 + $0x30] sm:$0xf]
    %v54 = vld [vmem:[%s0 + $0x34] sm:$0xf]
    %v55 = vld [vmem:[%s0 + $0x38] sm:$0xf]
    %v56 = vld [vmem:[%s0 + $0x3c] sm:$0xf]
    %v57 = vld [vmem:[%s1] sm:$0xf]
    %v58 = vld [vmem:[%s1 + $0x4] sm:$0xf]
    %v59 = vld [vmem:[%s1 + $0x8] sm:$0xf]
    %v60 = vld [vmem:[%s1 + $0xc] sm:$0xf]
    %v62 = vlaneseq
    %v63 = vshrl.u32 %v62, 7
    %v64 = vsub.s32 0, %v63
    %v65 = vrot.slane %v23, %v64
    %v83 = vunpack.c.l.b16 %v41
    %v84 = vunpack.c.l.b16 %v42
    %v85 = vunpack.c.l.b16 %v43
    %v86 = vunpack.c.l.b16 %v44
    %v87 = vunpack.c.l.b16 %v45
    %v88 = vunpack.c.l.b16 %v46
    %v89 = vunpack.c.l.b16 %v47
    %v90 = vunpack.c.l.b16 %v48
    %v91 = vunpack.c.l.b16 %v49
    %v92 = vunpack.c.l.b16 %v50
    %v93 = vunpack.c.l.b16 %v51
    %v94 = vunpack.c.l.b16 %v52
    %v95 = vunpack.c.l.b16 %v53
    %v96 = vunpack.c.l.b16 %v54
    %v97 = vunpack.c.l.b16 %v55
    %v98 = vunpack.c.l.b16 %v56
    %v99 = vpack.c.b16 %v84, %v83
    %v100 = vpack.c.b16 %v86, %v85
    %v101 = vpack.c.b16 %v88, %v87
    %v102 = vpack.c.b16 %v90, %v89
    %v103 = vpack.c.b16 %v92, %v91
    %v104 = vpack.c.b16 %v94, %v93
    %v105 = vpack.c.b16 %v96, %v95
    %v106 = vpack.c.b16 %v98, %v97
    %v111 = vunpack.c.l.b16 %v57
    %v112 = vunpack.c.l.b16 %v58
    %v113 = vunpack.c.l.b16 %v59
    %v114 = vunpack.c.l.b16 %v60
    %v115 = vpack.c.b16 %v112, %v111
    %v116 = vpack.c.b16 %v114, %v113
    %vm119 = vcmask 261120
    %v121 = vsel %vm119, %v99, 0
    %v124 = vsel %vm119, %v100, 0
    %v127 = vsel %vm119, %v101, 0
    %v130 = vsel %vm119, %v102, 0
    %v133 = vsel %vm119, %v103, 0
    %v136 = vsel %vm119, %v104, 0
    %v139 = vsel %vm119, %v105, 0
    %v142 = vsel %vm119, %v106, 0
    %144 = vmatprep.subr.bf16.mxu0 0
    %145 = vmatpush1.bf16.msra.mxu0 0
    %146 = vmatprep.subr.bf16.mxu0 0
    %147 = vmatpush1.bf16.msra.mxu0 0
    %148 = vmatprep.subr.bf16.mxu0 0
    %149 = vmatpush1.bf16.msra.mxu0 0
    %150 = vmatprep.subr.bf16.mxu0 0
    %151 = vmatpush1.bf16.msra.mxu0 0
    %152 = vmatprep.subr.bf16.mxu0 0
    %153 = vmatpush1.bf16.msra.mxu0 0
    %154 = vmatprep.subr.bf16.mxu0 0
    %155 = vmatpush1.bf16.msra.mxu0 0
    %156 = vmatprep.subr.bf16.mxu0 0
    %157 = vmatpush1.bf16.msra.mxu0 %v116
    %158 = vmatprep.subr.bf16.mxu0 0
    %159 = vmatpush1.bf16.msra.mxu0 %v115
    %160 = vmatprep.subr.bf16.mxu0 0
    %161 = vmatpush2.bf16.msra.mxu0 0
    %162 = vmatprep.subr.bf16.mxu0 0
    %163 = vmatpush2.bf16.msra.mxu0 0
    %164 = vmatprep.subr.bf16.mxu0 0
    %165 = vmatpush2.bf16.msra.mxu0 0
    %166 = vmatprep.subr.bf16.mxu0 0
    %167 = vmatpush2.bf16.msra.mxu0 0
    %168 = vmatprep.subr.bf16.mxu0 0
    %169 = vmatpush2.bf16.msra.mxu0 0
    %170 = vmatprep.subr.bf16.mxu0 0
    %171 = vmatpush2.bf16.msra.mxu0 0
    %172 = vmatprep.subr.bf16.mxu0 0
    %173 = vmatpush2.bf16.msra.mxu0 0
    %174 = vmatprep.subr.bf16.mxu0 0
    %175 = vmatpush2.bf16.msra.mxu0 0
    %176 = vmatprep.mubr.bf16.mxu0 0
    %177 = vmatmul.mubr.bf16.gmra.mxu0 %v121
    %v178 = vpop.f32.mrf.mxu0
    %v179 = vadd.f32 %v65, %v178
    %v180 = vpop.f32.mrf.mxu0
    %v181 = vpop.f32.mrf.mxu0
    %v182 = vadd.f32 %v65, %v181
    %v183 = vpop.f32.mrf.mxu0
    %184 = vmatprep.mubr.bf16.mxu0 0
    %185 = vmatmul.mubr.bf16.gmra.mxu0 %v124
    %v186 = vpop.f32.mrf.mxu0
    %v187 = vadd.f32 %v65, %v186
    %v188 = vpop.f32.mrf.mxu0
    %v189 = vpop.f32.mrf.mxu0
    %v190 = vadd.f32 %v65, %v189
    %v191 = vpop.f32.mrf.mxu0
    %192 = vmatprep.mubr.bf16.mxu0 0
    %193 = vmatmul.mubr.bf16.gmra.mxu0 %v127
    %v194 = vpop.f32.mrf.mxu0
    %v195 = vadd.f32 %v65, %v194
    %v196 = vpop.f32.mrf.mxu0
    %v197 = vpop.f32.mrf.mxu0
    %v198 = vadd.f32 %v65, %v197
    %v199 = vpop.f32.mrf.mxu0
    %200 = vmatprep.mubr.bf16.mxu0 0
    %201 = vmatmul.mubr.bf16.gmra.mxu0 %v130
    %v202 = vpop.f32.mrf.mxu0
    %v203 = vadd.f32 %v65, %v202
    %v204 = vpop.f32.mrf.mxu0
    %v205 = vpop.f32.mrf.mxu0
    %v206 = vadd.f32 %v65, %v205
    %v207 = vpop.f32.mrf.mxu0
    %208 = vmatprep.mubr.bf16.mxu0 0
    %209 = vmatmul.mubr.bf16.gmra.mxu0 %v133
    %v210 = vpop.f32.mrf.mxu0
    %v211 = vadd.f32 %v65, %v210
    %v212 = vpop.f32.mrf.mxu0
    %v213 = vpop.f32.mrf.mxu0
    %v214 = vadd.f32 %v65, %v213
    %v215 = vpop.f32.mrf.mxu0
    %216 = vmatprep.mubr.bf16.mxu0 0
    %217 = vmatmul.mubr.bf16.gmra.mxu0 %v136
    %v218 = vpop.f32.mrf.mxu0
    %v219 = vadd.f32 %v65, %v218
    %v220 = vpop.f32.mrf.mxu0
    %v221 = vpop.f32.mrf.mxu0
    %v222 = vadd.f32 %v65, %v221
    %v223 = vpop.f32.mrf.mxu0
    %224 = vmatprep.mubr.bf16.mxu0 0
    %225 = vmatmul.mubr.bf16.gmra.mxu0 %v139
    %v226 = vpop.f32.mrf.mxu0
    %v227 = vadd.f32 %v65, %v226
    %v228 = vpop.f32.mrf.mxu0
    %v229 = vpop.f32.mrf.mxu0
    %v230 = vadd.f32 %v65, %v229
    %v231 = vpop.f32.mrf.mxu0
    %232 = vmatprep.mubr.bf16.mxu0 0
    %233 = vmatmul.mubr.bf16.gmra.mxu0 %v142
    %v234 = vpop.f32.mrf.mxu0
    %v235 = vadd.f32 %v65, %v234
    %v236 = vpop.f32.mrf.mxu0
    %v237 = vpop.f32.mrf.mxu0
    %v238 = vadd.f32 %v65, %v237
    %v239 = vpop.f32.mrf.mxu0
    %240 = vdwg.mxu0
    %v241 = vmax.f32 %v179, 0.0
    %v242 = vmax.f32 %v182, 0.0
    %v243 = vmax.f32 %v187, 0.0
    %v244 = vmax.f32 %v190, 0.0
    %v245 = vmax.f32 %v195, 0.0
    %v246 = vmax.f32 %v198, 0.0
    %v247 = vmax.f32 %v203, 0.0
    %v248 = vmax.f32 %v206, 0.0
    %v249 = vmax.f32 %v211, 0.0
    %v250 = vmax.f32 %v214, 0.0
    %v251 = vmax.f32 %v219, 0.0
    %v252 = vmax.f32 %v222, 0.0
    %v253 = vmax.f32 %v227, 0.0
    %v254 = vmax.f32 %v230, 0.0
    %v255 = vmax.f32 %v235, 0.0
    %v256 = vmax.f32 %v238, 0.0
    %257 = vxpose.xlu0.b32.start [1/16] %v241, 128
    %258 = vxpose.xlu0.b32.cont [2/16] %v242, 128
    %259 = vxpose.xlu0.b32.cont [3/16] %v243, 128
    %260 = vxpose.xlu0.b32.cont [4/16] %v244, 128
    %261 = vxpose.xlu0.b32.cont [5/16] %v245, 128
    %262 = vxpose.xlu0.b32.cont [6/16] %v246, 128
    %263 = vxpose.xlu0.b32.cont [7/16] %v247, 128
    %264 = vxpose.xlu0.b32.cont [8/16] %v248, 128
    %265 = vxpose.xlu0.b32.cont [9/16] %v249, 128
    %266 = vxpose.xlu0.b32.cont [10/16] %v250, 128
    %267 = vxpose.xlu0.b32.cont [11/16] %v251, 128
    %268 = vxpose.xlu0.b32.cont [12/16] %v252, 128
    %269 = vxpose.xlu0.b32.cont [13/16] %v253, 128
    %270 = vxpose.xlu0.b32.cont [14/16] %v254, 128
    %271 = vxpose.xlu0.b32.cont [15/16] %v255, 128
    %272 = vxpose.xlu0.b32.end [16/16] %v256, 128
    %v273 = vpop.trf.xlu0
    %v274 = vpop.trf.xlu0
    %v275 = vpop.trf.xlu0
    %v276 = vpop.trf.xlu0
    %v277 = vpop.trf.xlu0
    %v278 = vpop.trf.xlu0
    %v279 = vpop.trf.xlu0
    %v280 = vpop.trf.xlu0
    %v281 = vpop.trf.xlu0
    %v282 = vpop.trf.xlu0
    %v283 = vpop.trf.xlu0
    %v284 = vpop.trf.xlu0
    %v285 = vpop.trf.xlu0
    %v286 = vpop.trf.xlu0
    %v287 = vpop.trf.xlu0
    %v288 = vpop.trf.xlu0
    %290 = vset.pattern.permute.xlu0 0
    %291 = vperm.xlu0 %290, %v24
    %v292 = vpop.permute.xlu0 %291
    %295 = vset.pattern.permute.xlu0 0
    %296 = vperm.xlu0 %295, %v25
    %v297 = vpop.permute.xlu0 %296
    %300 = vset.pattern.permute.xlu0 0
    %301 = vperm.xlu0 %300, %v26
    %v302 = vpop.permute.xlu0 %301
    %305 = vset.pattern.permute.xlu0 0
    %306 = vperm.xlu0 %305, %v27
    %v307 = vpop.permute.xlu0 %306
    %310 = vset.pattern.permute.xlu0 0
    %311 = vperm.xlu0 %310, %v28
    %v312 = vpop.permute.xlu0 %311
    %315 = vset.pattern.permute.xlu0 0
    %316 = vperm.xlu0 %315, %v29
    %v317 = vpop.permute.xlu0 %316
    %320 = vset.pattern.permute.xlu0 0
    %321 = vperm.xlu0 %320, %v30
    %v322 = vpop.permute.xlu0 %321
    %325 = vset.pattern.permute.xlu0 0
    %326 = vperm.xlu0 %325, %v31
    %v327 = vpop.permute.xlu0 %326
    %330 = vset.pattern.permute.xlu0 0
    %331 = vperm.xlu0 %330, %v32
    %v332 = vpop.permute.xlu0 %331
    %335 = vset.pattern.permute.xlu0 0
    %336 = vperm.xlu0 %335, %v33
    %v337 = vpop.permute.xlu0 %336
    %340 = vset.pattern.permute.xlu0 0
    %341 = vperm.xlu0 %340, %v34
    %v342 = vpop.permute.xlu0 %341
    %345 = vset.pattern.permute.xlu0 0
    %346 = vperm.xlu0 %345, %v35
    %v347 = vpop.permute.xlu0 %346
    %350 = vset.pattern.permute.xlu0 0
    %351 = vperm.xlu0 %350, %v36
    %v352 = vpop.permute.xlu0 %351
    %355 = vset.pattern.permute.xlu0 0
    %356 = vperm.xlu0 %355, %v37
    %v357 = vpop.permute.xlu0 %356
    %360 = vset.pattern.permute.xlu0 0
    %361 = vperm.xlu0 %360, %v38
    %v362 = vpop.permute.xlu0 %361
    %365 = vset.pattern.permute.xlu0 0
    %366 = vperm.xlu0 %365, %v39
    %v367 = vpop.permute.xlu0 %366
    %v369 = vmul.f32 %v273, %v292
    %v370 = vmul.f32 %v274, %v297
    %v371 = vmul.f32 %v275, %v302
    %v372 = vmul.f32 %v276, %v307
    %v373 = vmul.f32 %v277, %v312
    %v374 = vmul.f32 %v278, %v317
    %v375 = vmul.f32 %v279, %v322
    %v376 = vmul.f32 %v280, %v327
    %v377 = vmul.f32 %v281, %v332
    %v378 = vmul.f32 %v282, %v337
    %v379 = vmul.f32 %v283, %v342
    %v380 = vmul.f32 %v284, %v347
    %v381 = vmul.f32 %v285, %v352
    %v382 = vmul.f32 %v286, %v357
    %v383 = vmul.f32 %v287, %v362
    %v384 = vmul.f32 %v288, %v367
    %v385 = vadd.f32 %v369, %v370
    %v386 = vadd.f32 %v385, %v371
    %v387 = vadd.f32 %v386, %v372
    %v388 = vadd.f32 %v387, %v373
    %v389 = vadd.f32 %v388, %v374
    %v390 = vadd.f32 %v389, %v375
    %v391 = vadd.f32 %v390, %v376
    %v392 = vadd.f32 %v391, %v377
    %v393 = vadd.f32 %v392, %v378
    %v394 = vadd.f32 %v393, %v379
    %v395 = vadd.f32 %v394, %v380
    %v396 = vadd.f32 %v395, %v381
    %v397 = vadd.f32 %v396, %v382
    %v398 = vadd.f32 %v397, %v383
    %v399 = vadd.f32 %v398, %v384
    %v400 = vrot.slane %v399, 4
    %v401 = vadd.f32 %v399, %v400
    %v402 = vrot.slane %v401, 2
    %v403 = vadd.f32 %v401, %v402
    %v404 = vrot.slane %v403, 1
    %v405 = vadd.f32 %v403, %v404
    %v406 = vstv %s40
    %v407 = vadd.f32 %v405, %v406
    %408 = vst [vmem:[#allocation3] sm:$0x1] %v407
    // Predicated region
    $region22: #{tpu_custom_call.1} parent=1 // pred_check
      _
    $region23: #{tpu_custom_call.1} parent=1 // pred_check_branch
      %410 = sbr.rel (0) target = $region25
    $region24: #{tpu_custom_call.1} parent=1 // pred_region
      %s412 = ssub.s32 16, 16
      %413 = vsyncadd [#allocation4], %s412
      %s415 = sshll.u32 [#allocation3], 4
      %s416 = int_to_ptr.vmem [resolvable:$true] %s415
      %418 = dma.vmem_to_hbm [thread:$0]  %s416, 16, %s5, [#allocation4]
    $region25: #{tpu_custom_call.1} parent=1 // pred_fallthru
      _
    // Predicated region
    $region26: #{tpu_custom_call.1} parent=1 // pred_check
      _
    $region27: #{tpu_custom_call.1} parent=1 // pred_check_branch
      %420 = sbr.rel (0) target = $region29
    $region28: #{tpu_custom_call.1} parent=1 // pred_region
      %421 = dma.done [#allocation4], 16
    $region29: #{tpu_custom_call.1} parent=1 // pred_fallthru
      _
    %422 = vsyncpa [#allocation4], 1

</llo_original>
